<compile_context>
chip_gen: v7x
topology: tpu7x:2x2x1
jax: 0.10.0
libtpu: 0.0.40
codegen_flags: <defaults>
</compile_context>

<pallas_src>
import functools

import jax
import jax.numpy as jnp
from jax.experimental import pallas as pl
from jax.experimental.pallas import tpu as pltpu

NUM_CLASSES = 15
IGNORE_LABEL = 255
LANES = 128


def _round_up(v, m):
    return ((v + m - 1) // m) * m


def _lane_partial_sum(y, lanes=LANES):
    """(rows, k*lanes) -> (rows, lanes) partial sums using only 128-lane-aligned
    slices + VPU adds (no relayout / cross-lane XLU reduce).  Balanced tree to
    keep the dependency chain at log2(k) instead of k."""
    n = y.shape[-1]
    k = n // lanes
    parts = [y[:, m * lanes:(m + 1) * lanes] for m in range(k)]
    while len(parts) > 1:
        nxt = []
        for a in range(0, len(parts) - 1, 2):
            nxt.append(parts[a] + parts[a + 1])
        if len(parts) % 2:
            nxt.append(parts[-1])
        parts = nxt
    return parts[0]


def _loss_stats_kernel(x_ref, t_ref, tp_ref, fp_ref, fn_ref, ce_ref,
                       *, partial_type, do_bg_filter, hw, tile_n, ragged):
    C = NUM_CLASSES
    C2 = 1 + len(partial_type)

    first = (pl.program_id(0) == 0) & (pl.program_id(1) == 0)

    @pl.when(first)
    def _():
        tp_ref[...] = jnp.zeros_like(tp_ref)
        fp_ref[...] = jnp.zeros_like(fp_ref)
        fn_ref[...] = jnp.zeros_like(fn_ref)
        ce_ref[...] = jnp.zeros_like(ce_ref)

    x = x_ref[...].astype(jnp.float32)                     # (C, Tn)
    t_raw = t_ref[...]                                     # (1, Tn) int32

    if ragged:
        # positional validity for the ragged last tile; no HBM padding copy.
        tile_i = pl.program_id(1)
        lane_pos = jax.lax.broadcasted_iota(jnp.int32, (1, tile_n), 1)
        in_bounds = (tile_i * tile_n + lane_pos) < hw      # (1, Tn) bool
        validf = in_bounds.astype(jnp.float32)
        x = jnp.where(in_bounds, x, 0.0)                   # sanitize garbage tail
        t_raw = jnp.where(in_bounds, t_raw, -1)
    else:
        validf = None

    if do_bg_filter:
        # dense 15-class softmax max-prob + first-occurrence argmax
        best = jnp.max(x, axis=0, keepdims=True)                       # (1, Tn)
        idx = jax.lax.broadcasted_iota(jnp.int32, (C, tile_n), 0)
        cand = jnp.where(x == best, idx, C)
        best_idx = jnp.min(cand, axis=0, keepdims=True)                # (1, Tn)
        denom15 = jnp.sum(jnp.exp(x - best), axis=0, keepdims=True)    # dense exp
        max_prob = pl.reciprocal(denom15, approx=False)                # = max softmax
        is_fg = jnp.zeros(best_idx.shape, dtype=jnp.bool_)
        for c in partial_type:
            is_fg = jnp.logical_or(is_fg, best_idx == c)
        in_merge = jnp.logical_and(best_idx != 0, jnp.logical_not(is_fg))
        mask = jnp.logical_not(jnp.logical_and(max_prob > 0.8, in_merge))
        maskf = mask.astype(jnp.float32)
        eff = maskf if validf is None else maskf * validf
    else:
        eff = validf                                        # None when aligned

    # merge_prediction: bg channel = sum of logits over classes not in partial_type
    fg_rows = [x[c:c + 1, :] for c in partial_type]
    fg_sum = fg_rows[0]
    for r in fg_rows[1:]:
        fg_sum = fg_sum + r
    bg = jnp.sum(x, axis=0, keepdims=True) - fg_sum         # (1, Tn)
    newx = jnp.concatenate([bg] + fg_rows, axis=0)          # (C2, Tn)

    # sequential relabel (mirrors the in-place torch loop exactly)
    t_new = t_raw
    for k, label in enumerate(partial_type):
        t_new = jnp.where(t_new == label, jnp.full_like(t_new, k + 1), t_new)

    # one-hot via iota compare (dense VPU)
    cls_iota = jax.lax.broadcasted_iota(jnp.int32, (C2, tile_n), 0)
    onehot = (cls_iota == t_new).astype(jnp.float32)        # (C2, Tn)

    # softmax over merged channels
    m2 = jnp.max(newx, axis=0, keepdims=True)               # (1, Tn)
    e2 = jnp.exp(newx - m2)                                 # (C2, Tn)
    d2 = jnp.sum(e2, axis=0, keepdims=True)                 # (1, Tn)
    s = e2 * pl.reciprocal(d2, approx=False)                # (C2, Tn)

    # dice stats: tp = sum(s*oh*eff), fp = sum(s*eff) - tp, fn = sum(oh*eff) - tp
    if eff is not None:
        s_eff = s * eff
        oh_eff = onehot * eff
    else:
        s_eff = s
        oh_eff = onehot
    tp_full = s_eff * onehot

    tp_p = _lane_partial_sum(tp_full)                       # (C2, 128)
    sp_p = _lane_partial_sum(s_eff)                         # (C2, 128)
    op_p = _lane_partial_sum(oh_eff)                        # (C2, 128)

    tp_ref[...] += tp_p
    fp_ref[...] += sp_p - tp_p
    fn_ref[...] += op_p - tp_p

    # cross entropy on merged logits; masked / padded / ignore_label pixels skipped
    xt = jnp.sum(onehot * newx, axis=0, keepdims=True)      # (1, Tn)
    nll = jnp.log(d2) + m2 - xt                             # -log_softmax[t]
    ce_valid = (t_new != IGNORE_LABEL).astype(jnp.float32)
    if eff is not None:
        ce_valid = ce_valid * eff
    ce_s = _lane_partial_sum(nll * ce_valid)                # (1, 128)
    ce_c = _lane_partial_sum(ce_valid)                      # (1, 128)
    ce_ref[...] += jnp.concatenate([ce_s, ce_c], axis=0)    # (2, 128)


def dc_ce_partial_filter_loss(net_output, target, partial_type, do_bg_filter,
                              tile_n=8192, smooth=1e-5):
    """net_output: (B, 15, H, W) float logits (NCHW); target: (B, 1, H, W) int labels.

    Returns scalar loss = CE + SoftDice (batch_dice=True, do_bg=False)."""
    partial_type = tuple(int(p) for p in partial_type)
    B, C, H, W = net_output.shape
    assert C == NUM_CLASSES
    C2 = 1 + len(partial_type)
    HW = H * W
    N = B * HW

    # free reshapes only; logits keep their native layout (no extra HBM pass)
    x = net_output.reshape(B, C, HW)
    t = target.reshape(B, 1, HW).astype(jnp.int32)

    tile_n = int(tile_n)
    tile_n = min(tile_n, _round_up(HW, LANES))
    tile_n = max(LANES, _round_up(tile_n, LANES))
    num_tiles = pl.cdiv(HW, tile_n)
    ragged = (HW % tile_n) != 0
    grid = (B, num_tiles)

    kernel = functools.partial(_loss_stats_kernel,
                               partial_type=partial_type,
                               do_bg_filter=bool(do_bg_filter),
                               hw=HW, tile_n=tile_n, ragged=ragged)

    out_shapes = (
        jax.ShapeDtypeStruct((C2, LANES), jnp.float32),   # tp lane-partials
        jax.ShapeDtypeStruct((C2, LANES), jnp.float32),   # fp lane-partials
        jax.ShapeDtypeStruct((C2, LANES), jnp.float32),   # fn lane-partials
        jax.ShapeDtypeStruct((2, LANES), jnp.float32),    # [ce_sum; ce_count]
    )

    n_exp = (C + C2 + 1) if do_bg_filter else (C2 + 1)
    cost = pl.CostEstimate(
        flops=int((8 * C + 14 * C2) * N),
        transcendentals=int(n_exp * N),
        bytes_accessed=int(N * C * jnp.dtype(net_output.dtype).itemsize + N * 4),
    )

    tp, fp, fn, ce = pl.pallas_call(
        kernel,
        out_shape=out_shapes,
        grid_spec=pltpu.PrefetchScalarGridSpec(
            num_scalar_prefetch=0,
            grid=grid,
            in_specs=[pl.BlockSpec((None, C, tile_n), lambda b, i: (b, 0, i)),
                      pl.BlockSpec((None, 1, tile_n), lambda b, i: (b, 0, i))],
            out_specs=[pl.BlockSpec((C2, LANES), lambda b, i: (0, 0)),
                       pl.BlockSpec((C2, LANES), lambda b, i: (0, 0)),
                       pl.BlockSpec((C2, LANES), lambda b, i: (0, 0)),
                       pl.BlockSpec((2, LANES), lambda b, i: (0, 0))]),
        compiler_params=pltpu.CompilerParams(
            dimension_semantics=("arbitrary", "arbitrary")),
        cost_estimate=cost,
    )(x, t)

    tp = jnp.sum(tp, axis=1)
    fp = jnp.sum(fp, axis=1)
    fn = jnp.sum(fn, axis=1)
    ce_sum = jnp.sum(ce[0])
    ce_cnt = jnp.sum(ce[1])

    # SoftDiceLoss: batch_dice=True (sum over batch+spatial), do_bg=False
    nominator = 2.0 * tp + smooth
    denominator = 2.0 * tp + fp + fn + smooth
    dc = nominator / (denominator + 1e-8)
    dc_loss = -jnp.mean(dc[1:])

    # RobustCrossEntropyLoss(ignore_index=255), reduction='mean'
    ce_loss = ce_sum / ce_cnt

    return ce_loss + dc_loss     # aggregate == 'sum'


def _reference_loss(net_output, target, partial_type, do_bg_filter, smooth=1e-5):
    """Pure-JAX reference mirroring the PyTorch module, for verification."""
    B, C, H, W = net_output.shape
    partial_type = tuple(partial_type)
    x = net_output.astype(jnp.float32)
    t = target.reshape(B, 1, H, W).astype(jnp.int32)
    filter_classes = [c for c in range(1, C) if c not in partial_type]
    if do_bg_filter:
        p = jax.nn.softmax(x, axis=1)
        max_prob = jnp.max(p, axis=1)
        max_idx = jnp.argmax(p, axis=1)
        isin = jnp.isin(max_idx, jnp.array(filter_classes))
        mask = jnp.logical_not((max_prob > 0.8) & isin)[:, None]
    else:
        mask = jnp.ones((B, 1, H, W), dtype=bool)
    bg_classes = [c for c in range(0, C) if c not in partial_type]
    bg = x[:, bg_classes].sum(axis=1, keepdims=True)
    fg = x[:, list(partial_type)]
    newx = jnp.concatenate([bg, fg], axis=1)
    t_new = t
    for i, lab in enumerate(partial_type):
        t_new = jnp.where(t_new == lab, i + 1, t_new)
    C2 = 1 + len(partial_type)
    s = jax.nn.softmax(newx, axis=1)
    onehot = jax.nn.one_hot(t_new[:, 0], C2, axis=1, dtype=jnp.float32)
    m = mask.astype(jnp.float32)
    tp = jnp.sum(s * onehot * m, axis=(0, 2, 3))
    fp = jnp.sum(s * (1 - onehot) * m, axis=(0, 2, 3))
    fn = jnp.sum((1 - s) * onehot * m, axis=(0, 2, 3))
    dc = (2 * tp + smooth) / (2 * tp + fp + fn + smooth + 1e-8)
    dc_loss = -jnp.mean(dc[1:])
    logp = jax.nn.log_softmax(newx, axis=1)
    nll = -jnp.sum(onehot * logp, axis=1, keepdims=True)
    valid = m * (t_new != IGNORE_LABEL)
    ce_loss = jnp.sum(nll * valid) / jnp.sum(valid)
    return ce_loss + dc_loss


if __name__ == "__main__":
    key = jax.random.PRNGKey(0)
    B, C, H, W = 2, NUM_CLASSES, 16, 16
    partial_type = (1, 3, 6)            # classes annotated in this partial dataset

    k1, k2 = jax.random.split(key)
    net_output = jax.random.normal(k1, (B, C, H, W), dtype=jnp.float32) * 3.0
    # targets only contain background (0) + classes in partial_type (as in practice)
    labels = jnp.array((0,) + partial_type, dtype=jnp.int32)
    idx = jax.random.randint(k2, (B, 1, H, W), 0, labels.shape[0])
    target = labels[idx]

    loss = dc_ce_partial_filter_loss(net_output, target, partial_type,
                                     do_bg_filter=True)
    loss = jax.block_until_ready(loss)

    ref = jax.block_until_ready(
        _reference_loss(net_output, target, partial_type, do_bg_filter=True))
    assert jnp.allclose(loss, ref, rtol=1e-4, atol=1e-5), (loss, ref)

    # also exercise the do_bg_filter=False path
    loss2 = jax.block_until_ready(
        dc_ce_partial_filter_loss(net_output, target, partial_type,
                                  do_bg_filter=False))
    ref2 = jax.block_until_ready(
        _reference_loss(net_output, target, partial_type, do_bg_filter=False))
    assert jnp.allclose(loss2, ref2, rtol=1e-4, atol=1e-5), (loss2, ref2)

    # exercise a non-128-aligned spatial extent (ragged-tail path)
    k3, k4 = jax.random.split(k2)
    net3 = jax.random.normal(k3, (B, C, 12, 15), dtype=jnp.float32) * 3.0
    tgt3 = labels[jax.random.randint(k4, (B, 1, 12, 15), 0, labels.shape[0])]
    loss3 = jax.block_until_ready(
        dc_ce_partial_filter_loss(net3, tgt3, partial_type, do_bg_filter=True))
    ref3 = jax.block_until_ready(
        _reference_loss(net3, tgt3, partial_type, do_bg_filter=True))
    assert jnp.allclose(loss3, ref3, rtol=1e-4, atol=1e-5), (loss3, ref3)

    print("KERNEL_OK")
</pallas_src>

<mosaic_0001>
module attributes {stable_mosaic.version = 11 : i64} {
  func.func @_loss_stats_kernel(%arg0: i32, %arg1: i32, %arg2: memref<1x15x256xf32, #tpu.memory_space<vmem>>, %arg3: memref<1x1x256xi32, #tpu.memory_space<vmem>>, %arg4: memref<4x128xf32, #tpu.memory_space<vmem>>, %arg5: memref<4x128xf32, #tpu.memory_space<vmem>>, %arg6: memref<4x128xf32, #tpu.memory_space<vmem>>, %arg7: memref<2x128xf32, #tpu.memory_space<vmem>>) attributes {dimension_semantics = [#tpu.dimension_semantics<arbitrary>, #tpu.dimension_semantics<arbitrary>], iteration_bounds = array<i64: 2, 1>, scalar_prefetch = 0 : i64, scratch_operands = 0 : i64, tpu.core_type = #tpu.core_type<tc>, window_params = [{transform_indices = @transform_0, window_bounds = array<i64: 1, 15, 256>}, {transform_indices = @transform_1, window_bounds = array<i64: 1, 1, 256>}, {pipeline_mode = #tpu.pipeline_mode<synchronous>, transform_indices = @transform_2, window_bounds = array<i64: 4, 128>}, {pipeline_mode = #tpu.pipeline_mode<synchronous>, transform_indices = @transform_3, window_bounds = array<i64: 4, 128>}, {pipeline_mode = #tpu.pipeline_mode<synchronous>, transform_indices = @transform_4, window_bounds = array<i64: 4, 128>}, {pipeline_mode = #tpu.pipeline_mode<synchronous>, transform_indices = @transform_5, window_bounds = array<i64: 2, 128>}]} {
    %c0_i32 = arith.constant 0 : i32
    %0 = arith.cmpi eq, %arg0, %c0_i32 : i32
    %c0_i32_0 = arith.constant 0 : i32
    %1 = arith.cmpi eq, %arg1, %c0_i32_0 : i32
    %2 = arith.andi %0, %1 : i1
    %3 = arith.extui %2 : i1 to i32
    %c0_i32_1 = arith.constant 0 : i32
    %4 = arith.cmpi ne, %3, %c0_i32_1 : i32
    scf.if %4 {
      %cst_38 = arith.constant 0.000000e+00 : f32
      %127 = vector.broadcast %cst_38 : f32 to vector<4x128xf32>
      %c0_39 = arith.constant 0 : index
      %c0_40 = arith.constant 0 : index
      %128 = vector.load %arg4[%c0_39, %c0_40] : memref<4x128xf32, #tpu.memory_space<vmem>>, vector<4x128xf32>
      tpu.vector_store %arg4[%c0_39, %c0_40], %127 {strides = array<i32>} : memref<4x128xf32, #tpu.memory_space<vmem>>, vector<4x128xf32>,
      %cst_41 = arith.constant 0.000000e+00 : f32
      %129 = vector.broadcast %cst_41 : f32 to vector<4x128xf32>
      %c0_42 = arith.constant 0 : index
      %c0_43 = arith.constant 0 : index
      %130 = vector.load %arg5[%c0_42, %c0_43] : memref<4x128xf32, #tpu.memory_space<vmem>>, vector<4x128xf32>
      tpu.vector_store %arg5[%c0_42, %c0_43], %129 {strides = array<i32>} : memref<4x128xf32, #tpu.memory_space<vmem>>, vector<4x128xf32>,
      %cst_44 = arith.constant 0.000000e+00 : f32
      %131 = vector.broadcast %cst_44 : f32 to vector<4x128xf32>
      %c0_45 = arith.constant 0 : index
      %c0_46 = arith.constant 0 : index
      %132 = vector.load %arg6[%c0_45, %c0_46] : memref<4x128xf32, #tpu.memory_space<vmem>>, vector<4x128xf32>
      tpu.vector_store %arg6[%c0_45, %c0_46], %131 {strides = array<i32>} : memref<4x128xf32, #tpu.memory_space<vmem>>, vector<4x128xf32>,
      %cst_47 = arith.constant 0.000000e+00 : f32
      %133 = vector.broadcast %cst_47 : f32 to vector<2x128xf32>
      %c0_48 = arith.constant 0 : index
      %c0_49 = arith.constant 0 : index
      %134 = vector.load %arg7[%c0_48, %c0_49] : memref<2x128xf32, #tpu.memory_space<vmem>>, vector<2x128xf32>
      tpu.vector_store %arg7[%c0_48, %c0_49], %133 {strides = array<i32>} : memref<2x128xf32, #tpu.memory_space<vmem>>, vector<2x128xf32>,
    } else {
    }
    %c0 = arith.constant 0 : index
    %c0_2 = arith.constant 0 : index
    %c0_3 = arith.constant 0 : index
    %5 = vector.load %arg2[%c0, %c0_2, %c0_3] : memref<1x15x256xf32, #tpu.memory_space<vmem>>, vector<1x15x256xf32>
    %6 = vector.shape_cast %5 : vector<1x15x256xf32> to vector<15x256xf32>
    %c0_4 = arith.constant 0 : index
    %c0_5 = arith.constant 0 : index
    %c0_6 = arith.constant 0 : index
    %7 = vector.load %arg3[%c0_4, %c0_5, %c0_6] : memref<1x1x256xi32, #tpu.memory_space<vmem>>, vector<1x1x256xi32>
    %8 = vector.shape_cast %7 : vector<1x1x256xi32> to vector<1x256xi32>
    %cst = arith.constant dense<0xFF800000> : vector<256xf32>
    %9 = vector.multi_reduction <maximumf>, %6, %cst [0] : vector<15x256xf32> to vector<256xf32>
    %10 = vector.shape_cast %9 : vector<256xf32> to vector<1x256xf32>
    %11 = tpu.iota {dimensions = array<i32: 0>} : vector<15x256xi32>
    %12 = vector.broadcast %10 : vector<1x256xf32> to vector<15x256xf32>
    %13 = arith.cmpf oeq, %6, %12 : vector<15x256xf32>
    %c15_i32 = arith.constant 15 : i32
    %14 = vector.broadcast %c15_i32 : i32 to vector<15x256xi32>
    %15 = arith.select %13, %11, %14 : vector<15x256xi1>, vector<15x256xi32>
    %cst_7 = arith.constant dense<2147483647> : vector<256xi32>
    %16 = vector.multi_reduction <minsi>, %15, %cst_7 [0] : vector<15x256xi32> to vector<256xi32>
    %17 = vector.shape_cast %16 : vector<256xi32> to vector<1x256xi32>
    %18 = vector.broadcast %10 : vector<1x256xf32> to vector<15x256xf32>
    %19 = arith.subf %6, %18 : vector<15x256xf32>
    %20 = math.exp %19 : vector<15x256xf32>
    %cst_8 = arith.constant dense<0.000000e+00> : vector<256xf32>
    %21 = vector.multi_reduction <add>, %20, %cst_8 [0] : vector<15x256xf32> to vector<256xf32>
    %22 = vector.shape_cast %21 : vector<256xf32> to vector<1x256xf32>
    %23 = tpu.reciprocal %22 : vector<1x256xf32> -> vector<1x256xf32>
    %false = arith.constant false
    %24 = vector.broadcast %false : i1 to vector<1x256xi1>
    %c1_i32 = arith.constant 1 : i32
    %25 = vector.broadcast %c1_i32 : i32 to vector<1x256xi32>
    %26 = arith.cmpi eq, %17, %25 : vector<1x256xi32>
    %27 = arith.ori %24, %26 : vector<1x256xi1>
    %c3_i32 = arith.constant 3 : i32
    %28 = vector.broadcast %c3_i32 : i32 to vector<1x256xi32>
    %29 = arith.cmpi eq, %17, %28 : vector<1x256xi32>
    %30 = arith.ori %27, %29 : vector<1x256xi1>
    %c6_i32 = arith.constant 6 : i32
    %31 = vector.broadcast %c6_i32 : i32 to vector<1x256xi32>
    %32 = arith.cmpi eq, %17, %31 : vector<1x256xi32>
    %33 = arith.ori %30, %32 : vector<1x256xi1>
    %c0_i32_9 = arith.constant 0 : i32
    %34 = vector.broadcast %c0_i32_9 : i32 to vector<1x256xi32>
    %35 = arith.cmpi ne, %17, %34 : vector<1x256xi32>
    %cst_10 = arith.constant dense<true> : vector<1x256xi1>
    %36 = arith.xori %33, %cst_10 : vector<1x256xi1>
    %37 = arith.andi %35, %36 : vector<1x256xi1>
    %cst_11 = arith.constant 8.000000e-01 : f32
    %38 = vector.broadcast %cst_11 : f32 to vector<1x256xf32>
    %39 = arith.cmpf ogt, %23, %38 : vector<1x256xf32>
    %40 = arith.andi %39, %37 : vector<1x256xi1>
    %cst_12 = arith.constant dense<true> : vector<1x256xi1>
    %41 = arith.xori %40, %cst_12 : vector<1x256xi1>
    %42 = arith.extui %41 : vector<1x256xi1> to vector<1x256xi32>
    %43 = arith.sitofp %42 : vector<1x256xi32> to vector<1x256xf32>
    %44 = vector.extract_strided_slice %6 {offsets = [1, 0], sizes = [1, 256], strides = [1, 1]} : vector<15x256xf32> to vector<1x256xf32>
    %45 = vector.extract_strided_slice %6 {offsets = [3, 0], sizes = [1, 256], strides = [1, 1]} : vector<15x256xf32> to vector<1x256xf32>
    %46 = vector.extract_strided_slice %6 {offsets = [6, 0], sizes = [1, 256], strides = [1, 1]} : vector<15x256xf32> to vector<1x256xf32>
    %47 = arith.addf %44, %45 : vector<1x256xf32>
    %48 = arith.addf %47, %46 : vector<1x256xf32>
    %cst_13 = arith.constant dense<0.000000e+00> : vector<256xf32>
    %49 = vector.multi_reduction <add>, %6, %cst_13 [0] : vector<15x256xf32> to vector<256xf32>
    %50 = vector.shape_cast %49 : vector<256xf32> to vector<1x256xf32>
    %51 = arith.subf %50, %48 : vector<1x256xf32>
    %52 = tpu.concatenate %51, %44, %45, %46 in 0 : vector<1x256xf32>, vector<1x256xf32>, vector<1x256xf32>, vector<1x256xf32> -> vector<4x256xf32>
    %c1_i32_14 = arith.constant 1 : i32
    %53 = vector.broadcast %c1_i32_14 : i32 to vector<1x256xi32>
    %54 = arith.cmpi eq, %8, %53 : vector<1x256xi32>
    %c1_i32_15 = arith.constant 1 : i32
    %55 = vector.broadcast %c1_i32_15 : i32 to vector<1x256xi32>
    %56 = arith.select %54, %55, %8 : vector<1x256xi1>, vector<1x256xi32>
    %c3_i32_16 = arith.constant 3 : i32
    %57 = vector.broadcast %c3_i32_16 : i32 to vector<1x256xi32>
    %58 = arith.cmpi eq, %56, %57 : vector<1x256xi32>
    %c2_i32 = arith.constant 2 : i32
    %59 = vector.broadcast %c2_i32 : i32 to vector<1x256xi32>
    %60 = arith.select %58, %59, %56 : vector<1x256xi1>, vector<1x256xi32>
    %c6_i32_17 = arith.constant 6 : i32
    %61 = vector.broadcast %c6_i32_17 : i32 to vector<1x256xi32>
    %62 = arith.cmpi eq, %60, %61 : vector<1x256xi32>
    %c3_i32_18 = arith.constant 3 : i32
    %63 = vector.broadcast %c3_i32_18 : i32 to vector<1x256xi32>
    %64 = arith.select %62, %63, %60 : vector<1x256xi1>, vector<1x256xi32>
    %65 = tpu.iota {dimensions = array<i32: 0>} : vector<4x256xi32>
    %66 = vector.broadcast %64 : vector<1x256xi32> to vector<4x256xi32>
    %67 = arith.cmpi eq, %65, %66 : vector<4x256xi32>
    %68 = arith.extui %67 : vector<4x256xi1> to vector<4x256xi32>
    %69 = arith.sitofp %68 : vector<4x256xi32> to vector<4x256xf32>
    %cst_19 = arith.constant dense<0xFF800000> : vector<256xf32>
    %70 = vector.multi_reduction <maximumf>, %52, %cst_19 [0] : vector<4x256xf32> to vector<256xf32>
    %71 = vector.shape_cast %70 : vector<256xf32> to vector<1x256xf32>
    %72 = vector.broadcast %71 : vector<1x256xf32> to vector<4x256xf32>
    %73 = arith.subf %52, %72 : vector<4x256xf32>
    %74 = math.exp %73 : vector<4x256xf32>
    %cst_20 = arith.constant dense<0.000000e+00> : vector<256xf32>
    %75 = vector.multi_reduction <add>, %74, %cst_20 [0] : vector<4x256xf32> to vector<256xf32>
    %76 = vector.shape_cast %75 : vector<256xf32> to vector<1x256xf32>
    %77 = tpu.reciprocal %76 : vector<1x256xf32> -> vector<1x256xf32>
    %78 = vector.broadcast %77 : vector<1x256xf32> to vector<4x256xf32>
    %79 = arith.mulf %74, %78 : vector<4x256xf32>
    %80 = vector.broadcast %43 : vector<1x256xf32> to vector<4x256xf32>
    %81 = arith.mulf %79, %80 : vector<4x256xf32>
    %82 = vector.broadcast %43 : vector<1x256xf32> to vector<4x256xf32>
    %83 = arith.mulf %69, %82 : vector<4x256xf32>
    %84 = arith.mulf %81, %69 : vector<4x256xf32>
    %85 = vector.extract_strided_slice %84 {offsets = [0, 0], sizes = [4, 128], strides = [1, 1]} : vector<4x256xf32> to vector<4x128xf32>
    %86 = vector.extract_strided_slice %84 {offsets = [0, 128], sizes = [4, 128], strides = [1, 1]} : vector<4x256xf32> to vector<4x128xf32>
    %87 = arith.addf %85, %86 : vector<4x128xf32>
    %88 = vector.extract_strided_slice %81 {offsets = [0, 0], sizes = [4, 128], strides = [1, 1]} : vector<4x256xf32> to vector<4x128xf32>
    %89 = vector.extract_strided_slice %81 {offsets = [0, 128], sizes = [4, 128], strides = [1, 1]} : vector<4x256xf32> to vector<4x128xf32>
    %90 = arith.addf %88, %89 : vector<4x128xf32>
    %91 = vector.extract_strided_slice %83 {offsets = [0, 0], sizes = [4, 128], strides = [1, 1]} : vector<4x256xf32> to vector<4x128xf32>
    %92 = vector.extract_strided_slice %83 {offsets = [0, 128], sizes = [4, 128], strides = [1, 1]} : vector<4x256xf32> to vector<4x128xf32>
    %93 = arith.addf %91, %92 : vector<4x128xf32>
    %c0_21 = arith.constant 0 : index
    %c0_22 = arith.constant 0 : index
    %94 = vector.load %arg4[%c0_21, %c0_22] : memref<4x128xf32, #tpu.memory_space<vmem>>, vector<4x128xf32>
    %95 = arith.addf %94, %87 : vector<4x128xf32>
    %c0_23 = arith.constant 0 : index
    %c0_24 = arith.constant 0 : index
    %96 = vector.load %arg4[%c0_23, %c0_24] : memref<4x128xf32, #tpu.memory_space<vmem>>, vector<4x128xf32>
    tpu.vector_store %arg4[%c0_23, %c0_24], %95 {strides = array<i32>} : memref<4x128xf32, #tpu.memory_space<vmem>>, vector<4x128xf32>,
    %c0_25 = arith.constant 0 : index
    %c0_26 = arith.constant 0 : index
    %97 = vector.load %arg5[%c0_25, %c0_26] : memref<4x128xf32, #tpu.memory_space<vmem>>, vector<4x128xf32>
    %98 = arith.subf %90, %87 : vector<4x128xf32>
    %99 = arith.addf %97, %98 : vector<4x128xf32>
    %c0_27 = arith.constant 0 : index
    %c0_28 = arith.constant 0 : index
    %100 = vector.load %arg5[%c0_27, %c0_28] : memref<4x128xf32, #tpu.memory_space<vmem>>, vector<4x128xf32>
    tpu.vector_store %arg5[%c0_27, %c0_28], %99 {strides = array<i32>} : memref<4x128xf32, #tpu.memory_space<vmem>>, vector<4x128xf32>,
    %c0_29 = arith.constant 0 : index
    %c0_30 = arith.constant 0 : index
    %101 = vector.load %arg6[%c0_29, %c0_30] : memref<4x128xf32, #tpu.memory_space<vmem>>, vector<4x128xf32>
    %102 = arith.subf %93, %87 : vector<4x128xf32>
    %103 = arith.addf %101, %102 : vector<4x128xf32>
    %c0_31 = arith.constant 0 : index
    %c0_32 = arith.constant 0 : index
    %104 = vector.load %arg6[%c0_31, %c0_32] : memref<4x128xf32, #tpu.memory_space<vmem>>, vector<4x128xf32>
    tpu.vector_store %arg6[%c0_31, %c0_32], %103 {strides = array<i32>} : memref<4x128xf32, #tpu.memory_space<vmem>>, vector<4x128xf32>,
    %105 = arith.mulf %69, %52 : vector<4x256xf32>
    %cst_33 = arith.constant dense<0.000000e+00> : vector<256xf32>
    %106 = vector.multi_reduction <add>, %105, %cst_33 [0] : vector<4x256xf32> to vector<256xf32>
    %107 = vector.shape_cast %106 : vector<256xf32> to vector<1x256xf32>
    %108 = math.log %76 : vector<1x256xf32>
    %109 = arith.addf %108, %71 : vector<1x256xf32>
    %110 = arith.subf %109, %107 : vector<1x256xf32>
    %c255_i32 = arith.constant 255 : i32
    %111 = vector.broadcast %c255_i32 : i32 to vector<1x256xi32>
    %112 = arith.cmpi ne, %64, %111 : vector<1x256xi32>
    %113 = arith.extui %112 : vector<1x256xi1> to vector<1x256xi32>
    %114 = arith.sitofp %113 : vector<1x256xi32> to vector<1x256xf32>
    %115 = arith.mulf %114, %43 : vector<1x256xf32>
    %116 = arith.mulf %110, %115 : vector<1x256xf32>
    %117 = vector.extract_strided_slice %116 {offsets = [0, 0], sizes = [1, 128], strides = [1, 1]} : vector<1x256xf32> to vector<1x128xf32>
    %118 = vector.extract_strided_slice %116 {offsets = [0, 128], sizes = [1, 128], strides = [1, 1]} : vector<1x256xf32> to vector<1x128xf32>
    %119 = arith.addf %117, %118 : vector<1x128xf32>
    %120 = vector.extract_strided_slice %115 {offsets = [0, 0], sizes = [1, 128], strides = [1, 1]} : vector<1x256xf32> to vector<1x128xf32>
    %121 = vector.extract_strided_slice %115 {offsets = [0, 128], sizes = [1, 128], strides = [1, 1]} : vector<1x256xf32> to vector<1x128xf32>
    %122 = arith.addf %120, %121 : vector<1x128xf32>
    %c0_34 = arith.constant 0 : index
    %c0_35 = arith.constant 0 : index
    %123 = vector.load %arg7[%c0_34, %c0_35] : memref<2x128xf32, #tpu.memory_space<vmem>>, vector<2x128xf32>
    %124 = tpu.concatenate %119, %122 in 0 : vector<1x128xf32>, vector<1x128xf32> -> vector<2x128xf32>
    %125 = arith.addf %123, %124 : vector<2x128xf32>
    %c0_36 = arith.constant 0 : index
    %c0_37 = arith.constant 0 : index
    %126 = vector.load %arg7[%c0_36, %c0_37] : memref<2x128xf32, #tpu.memory_space<vmem>>, vector<2x128xf32>
    tpu.vector_store %arg7[%c0_36, %c0_37], %125 {strides = array<i32>} : memref<2x128xf32, #tpu.memory_space<vmem>>, vector<2x128xf32>,
    return
  }
  func.func @transform_0(%arg0: i32, %arg1: i32) -> (i32, i32, i32) {
    %c0_i32 = arith.constant 0 : i32
    %c0_i32_0 = arith.constant 0 : i32
    return %arg0, %c0_i32, %arg1 : i32, i32, i32
  }
  func.func @transform_1(%arg0: i32, %arg1: i32) -> (i32, i32, i32) {
    %c0_i32 = arith.constant 0 : i32
    %c0_i32_0 = arith.constant 0 : i32
    return %arg0, %c0_i32, %arg1 : i32, i32, i32
  }
  func.func @transform_2(%arg0: i32, %arg1: i32) -> (i32, i32) {
    %c0_i32 = arith.constant 0 : i32
    %c0_i32_0 = arith.constant 0 : i32
    %c0_i32_1 = arith.constant 0 : i32
    return %c0_i32, %c0_i32_0 : i32, i32
  }
  func.func @transform_3(%arg0: i32, %arg1: i32) -> (i32, i32) {
    %c0_i32 = arith.constant 0 : i32
    %c0_i32_0 = arith.constant 0 : i32
    %c0_i32_1 = arith.constant 0 : i32
    return %c0_i32, %c0_i32_0 : i32, i32
  }
  func.func @transform_4(%arg0: i32, %arg1: i32) -> (i32, i32) {
    %c0_i32 = arith.constant 0 : i32
    %c0_i32_0 = arith.constant 0 : i32
    %c0_i32_1 = arith.constant 0 : i32
    return %c0_i32, %c0_i32_0 : i32, i32
  }
  func.func @transform_5(%arg0: i32, %arg1: i32) -> (i32, i32) {
    %c0_i32 = arith.constant 0 : i32
    %c0_i32_0 = arith.constant 0 : i32
    %c0_i32_1 = arith.constant 0 : i32
    return %c0_i32, %c0_i32_0 : i32, i32
  }
}

</mosaic_0001>

<llo_original>
// kernel: tpu_custom_call.1
$region0: #{tpu_custom_call.1}
  #allocation0 [shape = 'u32[]', space=smem, size = 0x4, offset = 0x4, fixed_abs, tag = 'smem constant byte address 0x4 - core index']
  #allocation1 [shape = 'u32[144,128]{1,0:T(1,128)}', space=vmem, size = 0x12000, scoped, tag = 'internal scratch']
  %s0 = inlined_call_operand.vmem [shape: f32[2,15,256], index: 0, kind: input, shape index: {}]
  %s1 = inlined_call_operand.vmem [shape: s32[2,1,256], index: 1, kind: input, shape index: {}]
  %s2 = inlined_call_operand.hbm [shape: f32[4,128], index: 2, kind: output, shape index: {0}]
  %s3 = inlined_call_operand.hbm [shape: f32[4,128], index: 3, kind: output, shape index: {1}]
  %s4 = inlined_call_operand.hbm [shape: f32[4,128], index: 4, kind: output, shape index: {2}]
  %s5 = inlined_call_operand.hbm [shape: f32[2,128], index: 5, kind: output, shape index: {3}]
  %6 = xla_tuple %s2, %s3, %s4, %s5
  %s7 = sld [smem:[#allocation0]]
  $region69: #{tpu_custom_call.1} parent=0
    _
  %s9 = ssub.s32 1, %s7
  %s10 = scalar_select 0, %s9, %s7
  $region1: #{tpu_custom_call.1} parent=0
    #allocation2 [shape = 'u8[2048]{0}', space=vmem, size = 0x800, scoped, tag = 'output window, operand 0, single buffered']
    #allocation3 [shape = 's32[2]{0}', space=sflag, size = 0x8, scoped, tag = 'scoped memory for tpu_custom_call.1']
    #allocation4 [shape = 'u8[2048]{0}', space=vmem, size = 0x800, scoped, tag = 'output window, operand 1, single buffered']
    #allocation5 [shape = 's32[1]{0}', space=sflag, size = 0x4, scoped, tag = 'scoped memory for tpu_custom_call.1']
    #allocation6 [shape = 'u8[2048]{0}', space=vmem, size = 0x800, scoped, tag = 'output window, operand 2, single buffered']
    #allocation7 [shape = 'u8[1024]{0}', space=vmem, size = 0x400, scoped, tag = 'output window, operand 3, single buffered']
    #allocation8 [shape = 's32[1]{0}', space=sflag, size = 0x4, scoped, tag = 'scoped memory for tpu_custom_call.1']
    %11 = vsyncpa [#allocation3], 0
    %12 = vsyncpa [#allocation5], 0
    %13 = vsyncpa [#allocation8], 0
    loop: start=0, step=1, limit=4
    $region2: #{tpu_custom_call.1} parent=1 // loop_pre_header
      _
    $region3: #{tpu_custom_call.1} parent=1 // loop_header
      %s15 = sphi 0, %s19
      %p16 = scmp.ge.s32.totalorder %s15, 4
      %s22 = sphi 0, %s34
      %s23 = sphi 0, %s30
      %s24 = sphi 0, %s22
      %s25 = sphi 0, %s23
      %s26 = sphi 0, %s24
      %s27 = sphi 0, %s25
      %s39 = sphi 0, %s41
      %s42 = sphi 0, %s39
      %s43 = sphi 0, %s42
      %s59 = sphi 0, %s43
      %s67 = sphi 0, %s69
      %s70 = sphi 0, %s67
      %s71 = sphi 0, %s70
      %s87 = sphi 0, %s71
      %s91 = sphi 0, %s91
      %s93 = sphi 0, %s91
      %s94 = sphi 0, %s93
      %s108 = sphi 0, %s94
      %s112 = sphi 0, %s112
      %s114 = sphi 0, %s112
      %s115 = sphi 0, %s114
      %s129 = sphi 0, %s115
      %s133 = sphi 0, %s133
      %s135 = sphi 0, %s133
      %s136 = sphi 0, %s135
      %s150 = sphi 0, %s136
      %s154 = sphi 0, %s154
      %s156 = sphi 0, %s154
      %s157 = sphi 0, %s156
      %s171 = sphi 0, %s157
    $region4: #{tpu_custom_call.1} parent=1 // loop_header_branch
      %18 = sbr.rel (%p16) target = $region8
    $region5: #{tpu_custom_call.1} parent=1 // loop_body
      %s20 = ssub.s32 %s15, 1
      %s21 = ssub.s32 %s15, 2
      %s28 = sadd.s32 1, %s23
      %p29 = scmp.ge.s32.totalorder %s28, 1
      %s30 = scalar_select %p29, 0, %s28
      %s31 = sadd.s32 1, %s22
      %s32 = scalar_select %p29, %s31, %s22
      %p33 = scmp.ge.s32.totalorder %s32, 2
      %s34 = scalar_select %p33, 0, %s32
      %s35 = ssub.s32 %s22, %s34
      %s36 = ssub.s32 %s23, %s30
      %s37 = sor.u32 %s35, %s36
      %p38 = scmp.eq.s32.totalorder %s37, 0
      %s40 = sadd.s32 %s39, 1
      %s41 = scalar_select %p38, %s39, %s40
      %p44 = pneg %p38
      %p45 = scmp.eq.s32.totalorder %s15, 1
      %p46 = por %p44, %p45
      %p47 = scmp.ne.s32.totalorder %s39, %s42
      %p48 = scmp.eq.s32.totalorder %s15, 0
      %p49 = por %p47, %p48
      %p50 = scmp.ne.s32.totalorder %s39, %s42
      %p51 = scmp.eq.s32.totalorder %s20, 1
      %p52 = por %p50, %p51
      %p53 = scmp.ne.s32.totalorder %s42, %s43
      %p54 = scmp.eq.s32.totalorder %s20, 0
      %p55 = por %p53, %p54
      %p56 = scmp.ne.s32.totalorder %s42, %s43
      %p57 = scmp.eq.s32.totalorder %s21, 1
      %p58 = por %p56, %p57
      %p60 = scmp.ne.s32.totalorder %s43, %s59
      %p61 = scmp.eq.s32.totalorder %s21, 0
      %p62 = por %p60, %p61
      %s63 = ssub.s32 %s22, %s34
      %s64 = ssub.s32 %s23, %s30
      %s65 = sor.u32 %s63, %s64
      %p66 = scmp.eq.s32.totalorder %s65, 0
      %s68 = sadd.s32 %s67, 1
      %s69 = scalar_select %p66, %s67, %s68
      %p72 = pneg %p66
      %p73 = scmp.eq.s32.totalorder %s15, 1
      %p74 = por %p72, %p73
      %p75 = scmp.ne.s32.totalorder %s67, %s70
      %p76 = scmp.eq.s32.totalorder %s15, 0
      %p77 = por %p75, %p76
      %p78 = scmp.ne.s32.totalorder %s67, %s70
      %p79 = scmp.eq.s32.totalorder %s20, 1
      %p80 = por %p78, %p79
      %p81 = scmp.ne.s32.totalorder %s70, %s71
      %p82 = scmp.eq.s32.totalorder %s20, 0
      %p83 = por %p81, %p82
      %p84 = scmp.ne.s32.totalorder %s70, %s71
      %p85 = scmp.eq.s32.totalorder %s21, 1
      %p86 = por %p84, %p85
      %p88 = scmp.ne.s32.totalorder %s71, %s87
      %p89 = scmp.eq.s32.totalorder %s21, 0
      %p90 = por %p88, %p89
      %s92 = sadd.s32 %s91, 1
      %p95 = scmp.eq.s32.totalorder %s15, 1
      %p96 = scmp.ne.s32.totalorder %s91, %s93
      %p97 = scmp.eq.s32.totalorder %s15, 0
      %p98 = por %p96, %p97
      %p99 = scmp.ne.s32.totalorder %s91, %s93
      %p100 = scmp.eq.s32.totalorder %s20, 1
      %p101 = por %p99, %p100
      %p102 = scmp.ne.s32.totalorder %s93, %s94
      %p103 = scmp.eq.s32.totalorder %s20, 0
      %p104 = por %p102, %p103
      %p105 = scmp.ne.s32.totalorder %s93, %s94
      %p106 = scmp.eq.s32.totalorder %s21, 1
      %p107 = por %p105, %p106
      %p109 = scmp.ne.s32.totalorder %s94, %s108
      %p110 = scmp.eq.s32.totalorder %s21, 0
      %p111 = por %p109, %p110
      %s113 = sadd.s32 %s112, 1
      %p116 = scmp.eq.s32.totalorder %s15, 1
      %p117 = scmp.ne.s32.totalorder %s112, %s114
      %p118 = scmp.eq.s32.totalorder %s15, 0
      %p119 = por %p117, %p118
      %p120 = scmp.ne.s32.totalorder %s112, %s114
      %p121 = scmp.eq.s32.totalorder %s20, 1
      %p122 = por %p120, %p121
      %p123 = scmp.ne.s32.totalorder %s114, %s115
      %p124 = scmp.eq.s32.totalorder %s20, 0
      %p125 = por %p123, %p124
      %p126 = scmp.ne.s32.totalorder %s114, %s115
      %p127 = scmp.eq.s32.totalorder %s21, 1
      %p128 = por %p126, %p127
      %p130 = scmp.ne.s32.totalorder %s115, %s129
      %p131 = scmp.eq.s32.totalorder %s21, 0
      %p132 = por %p130, %p131
      %s134 = sadd.s32 %s133, 1
      %p137 = scmp.eq.s32.totalorder %s15, 1
      %p138 = scmp.ne.s32.totalorder %s133, %s135
      %p139 = scmp.eq.s32.totalorder %s15, 0
      %p140 = por %p138, %p139
      %p141 = scmp.ne.s32.totalorder %s133, %s135
      %p142 = scmp.eq.s32.totalorder %s20, 1
      %p143 = por %p141, %p142
      %p144 = scmp.ne.s32.totalorder %s135, %s136
      %p145 = scmp.eq.s32.totalorder %s20, 0
      %p146 = por %p144, %p145
      %p147 = scmp.ne.s32.totalorder %s135, %s136
      %p148 = scmp.eq.s32.totalorder %s21, 1
      %p149 = por %p147, %p148
      %p151 = scmp.ne.s32.totalorder %s136, %s150
      %p152 = scmp.eq.s32.totalorder %s21, 0
      %p153 = por %p151, %p152
      %s155 = sadd.s32 %s154, 1
      %p158 = scmp.eq.s32.totalorder %s15, 1
      %p159 = scmp.ne.s32.totalorder %s154, %s156
      %p160 = scmp.eq.s32.totalorder %s15, 0
      %p161 = por %p159, %p160
      %p162 = scmp.ne.s32.totalorder %s154, %s156
      %p163 = scmp.eq.s32.totalorder %s20, 1
      %p164 = por %p162, %p163
      %p165 = scmp.ne.s32.totalorder %s156, %s157
      %p166 = scmp.eq.s32.totalorder %s20, 0
      %p167 = por %p165, %p166
      %p168 = scmp.ne.s32.totalorder %s156, %s157
      %p169 = scmp.eq.s32.totalorder %s21, 1
      %p170 = por %p168, %p169
      %p172 = scmp.ne.s32.totalorder %s157, %s171
      %p173 = scmp.eq.s32.totalorder %s21, 0
      %p174 = por %p172, %p173
      %p175 = scmp.le.s32.totalorder 1, %s15
      %p176 = scmp.lt.s32.totalorder %s15, 3
      %p177 = pnand %p175, %p176
      %p178 = pneg %p177
      // Predicated region
      $region9: #{tpu_custom_call.1} parent=5 // pred_check
        _
      $region10: #{tpu_custom_call.1} parent=5 // pred_check_branch
        %180 = sbr.rel (%p177) target = $region12
      $region11: #{tpu_custom_call.1} parent=5 // pred_region
        %s181 = ssub.s32 %s15, 1
      $region12: #{tpu_custom_call.1} parent=5 // pred_fallthru
        _
      %p182 = scmp.lt.s32.totalorder %s15, 2
      // Predicated region
      $region13: #{tpu_custom_call.1} parent=5 // pred_check
        %p183 = pneg %p182
      $region14: #{tpu_custom_call.1} parent=5 // pred_check_branch
        %185 = sbr.rel (%p183) target = $region16
      $region15: #{tpu_custom_call.1} parent=5 // pred_region
        // Predicated region
        $region17: #{tpu_custom_call.1} parent=15 // pred_check
          %p186 = pneg %p49
        $region18: #{tpu_custom_call.1} parent=15 // pred_check_branch
          %188 = sbr.rel (%p186) target = $region20
        $region19: #{tpu_custom_call.1} parent=15 // pred_region
          %s189 = smul.u32 2, %s23
          %p190 = scmp.lt.s32.totalorder %s22, 1
          %s191 = scalar_select %p190, %s22, 1
          %p192 = scmp.lt.s32.totalorder %s189, 1
          %s193 = scalar_select %p192, %s189, 1
          %s194 = smul.addr %s191, 4
          %s195 = sadd.s32 %s193, %s194
          %s196 = smul.addr %s195, 8
          %s197 = scalar_lea.vmem %s0, %s196
          %s198 = smul.u32 2, %s23
        $region20: #{tpu_custom_call.1} parent=15 // pred_fallthru
          _
        // Predicated region
        $region21: #{tpu_custom_call.1} parent=15 // pred_check
          %p199 = pneg %p77
        $region22: #{tpu_custom_call.1} parent=15 // pred_check_branch
          %201 = sbr.rel (%p199) target = $region24
        $region23: #{tpu_custom_call.1} parent=15 // pred_region
          %s202 = smul.u32 2, %s23
          %p203 = scmp.lt.s32.totalorder %s22, 1
          %s204 = scalar_select %p203, %s22, 1
          %p205 = scmp.lt.s32.totalorder %s202, 1
          %s206 = scalar_select %p205, %s202, 1
          %s207 = smul.addr %s204, 2
          %s208 = sadd.s32 %s206, %s207
          %s209 = scalar_lea.vmem %s1, %s208
          %s210 = smul.u32 2, %s23
        $region24: #{tpu_custom_call.1} parent=15 // pred_fallthru
          _
      $region16: #{tpu_custom_call.1} parent=5 // pred_fallthru
        _
      %p211 = scmp.le.s32.totalorder 1, %s15
      %p212 = scmp.lt.s32.totalorder %s15, 3
      %p213 = pnand %p211, %p212
      %p214 = pneg %p213
      // Predicated region
      $region25: #{tpu_custom_call.1} parent=5 // pred_check
        _
      $region26: #{tpu_custom_call.1} parent=5 // pred_check_branch
        %216 = sbr.rel (%p213) target = $region28
      $region27: #{tpu_custom_call.1} parent=5 // pred_region
        %s217 = ssub.s32 %s15, 1
        %s218 = smul.u32 2, %s25
        %p219 = scmp.lt.s32.totalorder %s24, 1
        %s220 = scalar_select %p219, %s24, 1
        %p221 = scmp.lt.s32.totalorder %s218, 1
        %s222 = scalar_select %p221, %s218, 1
        %s223 = smul.addr %s220, 4
        %s224 = sadd.s32 %s222, %s223
        %s225 = smul.addr %s224, 8
        %s226 = scalar_lea.vmem %s0, %s225
        %p227 = pneg %p55
        %p228 = pneg %p52
        %s229 = smul.u32 2, %s25
        %p230 = scmp.lt.s32.totalorder %s24, 1
        %s231 = scalar_select %p230, %s24, 1
        %p232 = scmp.lt.s32.totalorder %s229, 1
        %s233 = scalar_select %p232, %s229, 1
        %s234 = smul.addr %s231, 2
        %s235 = sadd.s32 %s233, %s234
        %s236 = scalar_lea.vmem %s1, %s235
        %p237 = pneg %p83
        %p238 = pneg %p80
        %p239 = pneg %p104
        %p240 = pneg %p101
        %p241 = pneg %p125
        %p242 = pneg %p122
        %p243 = pneg %p146
        %p244 = pneg %p143
        %p245 = pneg %p167
        %p246 = pneg %p164
        %s247 = smul.u32 2, %s25
        %p248 = scmp.lt.s32.totalorder %s24, 1
        %s249 = scalar_select %p248, %s24, 1
        %p250 = scmp.lt.s32.totalorder %s247, 1
        %s251 = scalar_select %p250, %s247, 1
        %s252 = smul.addr %s249, 4
        %s253 = sadd.s32 %s251, %s252
        %s254 = smul.addr %s253, 8
        %s255 = scalar_lea.vmem %s0, %s254
        %s256 = smul.u32 2, %s25
        %s257 = smul.u32 2, %s25
        %p258 = scmp.lt.s32.totalorder %s24, 1
        %s259 = scalar_select %p258, %s24, 1
        %p260 = scmp.lt.s32.totalorder %s257, 1
        %s261 = scalar_select %p260, %s257, 1
        %s262 = smul.addr %s259, 2
        %s263 = sadd.s32 %s261, %s262
        %s264 = scalar_lea.vmem %s1, %s263
        %s265 = smul.u32 2, %s25
        %p266 = scmp.eq.s32.totalorder %s24, 0
        %p267 = scmp.eq.s32.totalorder %s25, 0
        %p268 = pnand %p266, %p267
        %p269 = pneg %p268
        // Predicated region
        $region29: #{tpu_custom_call.1} parent=27 // pred_check
          _
        $region30: #{tpu_custom_call.1} parent=27 // pred_check_branch
          %271 = sbr.rel (%p268) target = $region32
        $region31: #{tpu_custom_call.1} parent=27 // pred_region
          %272 = vst [vmem:[#allocation2] sm:$0xf] 0.0
          %273 = vst [vmem:[#allocation4] sm:$0xf] 0.0
          %274 = vst [vmem:[#allocation6] sm:$0xf] 0.0
          %275 = vst [vmem:[#allocation7] sm:$0x3] 0.0
        $region32: #{tpu_custom_call.1} parent=27 // pred_fallthru
          _
        %v276 = vld [vmem:[%s255] sm:$0xff]
        %v277 = vld [vmem:[%s255 + $0x8] sm:$0xff]
        %v278 = vld [vmem:[%s255 + $0x10] sm:$0x7f]
        %v279 = vld [vmem:[%s255 + $0x18] sm:$0x7f]
        %v280 = vld [vmem:[%s264] sm:$0x3]
        %vm281 = vcmask 1046528
        %v282 = vsel %vm281, %v278, -inf
        %v283 = vmax.f32 %v276, %v282
        %v284 = vrot.slane %v283, 4
        %v285 = vmax.f32 %v283, %v284
        %v286 = vrot.slane %v285, 2
        %v287 = vmax.f32 %v285, %v286
        %v288 = vrot.slane %v287, 1
        %v289 = vmax.f32 %v287, %v288
        %v290 = vsel %vm281, %v279, -inf
        %v291 = vmax.f32 %v277, %v290
        %v292 = vrot.slane %v291, 4
        %v293 = vmax.f32 %v291, %v292
        %v294 = vrot.slane %v293, 2
        %v295 = vmax.f32 %v293, %v294
        %v296 = vrot.slane %v295, 1
        %v297 = vmax.f32 %v295, %v296
        %v298 = vlaneseq
        %v299 = vshrl.u32 %v298, 7
        %v300 = vadd.s32 %v299, 8
        %vm301 = vcmp.eq.f32.partialorder %v276, %v289
        %vm302 = vcmp.eq.f32.partialorder %v277, %v297
        %vm303 = vcmp.eq.f32.partialorder %v278, %v289
        %vm304 = vcmp.eq.f32.partialorder %v279, %v297
        %v305 = vsel %vm301, %v299, 15
        %v306 = vsel %vm302, %v299, 15
        %v307 = vsel %vm303, %v300, 15
        %v308 = vsel %vm304, %v300, 15
        %v309 = vsel %vm281, %v307, 2147483647
        %vm310 = vcmp.lt.s32.totalorder %v305, %v309
        %v311 = vsel %vm310, %v305, %v309
        %v312 = vrot.slane %v311, 4
        %vm313 = vcmp.lt.s32.totalorder %v311, %v312
        %v314 = vsel %vm313, %v311, %v312
        %v315 = vrot.slane %v314, 2
        %vm316 = vcmp.lt.s32.totalorder %v314, %v315
        %v317 = vsel %vm316, %v314, %v315
        %v318 = vrot.slane %v317, 1
        %vm319 = vcmp.lt.s32.totalorder %v317, %v318
        %v320 = vsel %vm319, %v317, %v318
        %v321 = vsel %vm281, %v308, 2147483647
        %vm322 = vcmp.lt.s32.totalorder %v306, %v321
        %v323 = vsel %vm322, %v306, %v321
        %v324 = vrot.slane %v323, 4
        %vm325 = vcmp.lt.s32.totalorder %v323, %v324
        %v326 = vsel %vm325, %v323, %v324
        %v327 = vrot.slane %v326, 2
        %vm328 = vcmp.lt.s32.totalorder %v326, %v327
        %v329 = vsel %vm328, %v326, %v327
        %v330 = vrot.slane %v329, 1
        %vm331 = vcmp.lt.s32.totalorder %v329, %v330
        %v332 = vsel %vm331, %v329, %v330
        %v333 = vsub.f32 %v276, %v289
        %v334 = vsub.f32 %v277, %v297
        %v335 = vsub.f32 %v278, %v289
        %v336 = vsub.f32 %v279, %v297
        %v337 = vmul.f32 %v333, 1.442695
        %v338 = vpow.pop %v337
        %v339 = vmul.f32 %v334, 1.442695
        %v340 = vpow.pop %v339
        %v341 = vmul.f32 %v335, 1.442695
        %v342 = vpow.pop %v341
        %v343 = vmul.f32 %v336, 1.442695
        %v344 = vpow.pop %v343
        %v345 = vsel %vm281, %v342, 0.0
        %v346 = vadd.f32 %v338, %v345
        %v347 = vrot.slane %v346, 4
        %v348 = vadd.f32 %v346, %v347
        %v349 = vrot.slane %v348, 2
        %v350 = vadd.f32 %v348, %v349
        %v351 = vrot.slane %v350, 1
        %v352 = vadd.f32 %v350, %v351
        %v353 = vsel %vm281, %v344, 0.0
        %v354 = vadd.f32 %v340, %v353
        %v355 = vrot.slane %v354, 4
        %v356 = vadd.f32 %v354, %v355
        %v357 = vrot.slane %v356, 2
        %v358 = vadd.f32 %v356, %v357
        %v359 = vrot.slane %v358, 1
        %v360 = vadd.f32 %v358, %v359
        %v361 = vrcp.pop %v352
        %v362 = vrcp.pop %v360
        %vm363 = vcmp.eq.s32.totalorder %v320, 1
        %vm364 = vcmp.eq.s32.totalorder %v332, 1
        %vm365 = vcmp.eq.s32.totalorder %v320, 3
        %vm366 = vcmp.eq.s32.totalorder %v332, 3
        %vm367 = vmor %vm363, %vm365
        %vm368 = vmor %vm364, %vm366
        %vm369 = vcmp.eq.s32.totalorder %v320, 6
        %vm370 = vcmp.eq.s32.totalorder %v332, 6
        %vm371 = vmor %vm367, %vm369
        %vm372 = vmor %vm368, %vm370
        %vm373 = vcmp.ne.s32.totalorder %v320, 0
        %vm374 = vcmp.ne.s32.totalorder %v332, 0
        %vm375 = vmxor %vm371, 1
        %vm376 = vmxor %vm372, 1
        %vm377 = vmand %vm373, %vm375
        %vm378 = vmand %vm374, %vm376
        %vm379 = vcmp.gt.f32.partialorder %v361, 0.8
        %vm380 = vcmp.gt.f32.partialorder %v362, 0.8
        %vm381 = vmand %vm379, %vm377
        %vm382 = vmand %vm380, %vm378
        %vm383 = vmxor %vm381, 1
        %vm384 = vmxor %vm382, 1
        %v385 = vsel %vm383, 1, 0
        %v386 = vsel %vm384, 1, 0
        %v387 = vcvt.s32.f32 %v385
        %v388 = vcvt.s32.f32 %v386
        %v391 = vrot.slane %v276, 2
        %v392 = vrot.slane %v277, 2
        %v395 = vadd.f32 %v276, %v391
        %v396 = vadd.f32 %v277, %v392
        %v397 = vrot.slane %v276, 5
        %v398 = vrot.slane %v277, 5
        %v401 = vadd.f32 %v395, %v397
        %v402 = vadd.f32 %v396, %v398
        %v403 = vsel %vm281, %v278, 0.0
        %v404 = vadd.f32 %v276, %v403
        %v405 = vrot.slane %v404, 4
        %v406 = vadd.f32 %v404, %v405
        %v407 = vrot.slane %v406, 2
        %v408 = vadd.f32 %v406, %v407
        %v409 = vrot.slane %v408, 1
        %v410 = vadd.f32 %v408, %v409
        %v411 = vsel %vm281, %v279, 0.0
        %v412 = vadd.f32 %v277, %v411
        %v413 = vrot.slane %v412, 4
        %v414 = vadd.f32 %v412, %v413
        %v415 = vrot.slane %v414, 2
        %v416 = vadd.f32 %v414, %v415
        %v417 = vrot.slane %v416, 1
        %v418 = vadd.f32 %v416, %v417
        %v419 = vsub.f32 %v410, %v401
        %v420 = vsub.f32 %v418, %v402
        %v423 = vrot.slane %v419, 1
        %v424 = vrot.slane %v420, 1
        %v427 = vrot.slane %v276, 1
        %v428 = vrot.slane %v277, 1
        %v431 = vrot.slane %v276, 3
        %v432 = vrot.slane %v277, 3
        %vm435 = vcmask 1040384
        %v436 = vsel %vm435, %v423, %v276
        %v437 = vsel %vm435, %v424, %v277
        %vm438 = vcmask 1041408
        %v439 = vsel %vm438, %v436, %v427
        %v440 = vsel %vm438, %v437, %v428
        %vm441 = vcmask 1042432
        %v442 = vsel %vm441, %v439, %v431
        %v443 = vsel %vm441, %v440, %v432
        %vm444 = vcmp.eq.s32.totalorder %v280, 3
        %v445 = vsel %vm444, 2, %v280
        %vm446 = vcmp.eq.s32.totalorder %v445, 6
        %v447 = vsel %vm446, 3, %v445
        %v448 = vlaneseq
        %v449 = vshrl.u32 %v448, 7
        %v450 = vsub.s32 0, %v449
        %v451 = vrot.slane %v447, %v450
        %v452 = vlaneseq
        %v453 = vshrl.u32 %v452, 7
        %v454 = vsub.s32 1, %v453
        %v455 = vrot.slane %v447, %v454
        %vm456 = vcmp.eq.s32.totalorder %v299, %v451
        %vm457 = vcmp.eq.s32.totalorder %v299, %v455
        %v458 = vsel %vm456, 1, 0
        %v459 = vsel %vm457, 1, 0
        %v460 = vcvt.s32.f32 %v458
        %v461 = vcvt.s32.f32 %v459
        %vm462 = vcmask 1043456
        %v463 = vsel %vm462, %v442, -inf
        %v464 = vrot.slane %v463, 4
        %v465 = vmax.f32 %v463, %v464
        %v466 = vrot.slane %v465, 2
        %v467 = vmax.f32 %v465, %v466
        %v468 = vrot.slane %v467, 1
        %v469 = vmax.f32 %v467, %v468
        %v470 = vsel %vm462, %v443, -inf
        %v471 = vrot.slane %v470, 4
        %v472 = vmax.f32 %v470, %v471
        %v473 = vrot.slane %v472, 2
        %v474 = vmax.f32 %v472, %v473
        %v475 = vrot.slane %v474, 1
        %v476 = vmax.f32 %v474, %v475
        %v477 = vsub.f32 %v442, %v469
        %v478 = vsub.f32 %v443, %v476
        %v479 = vmul.f32 %v477, 1.442695
        %v480 = vpow.pop %v479
        %v481 = vmul.f32 %v478, 1.442695
        %v482 = vpow.pop %v481
        %v483 = vsel %vm462, %v480, 0.0
        %v484 = vrot.slane %v483, 4
        %v485 = vadd.f32 %v483, %v484
        %v486 = vrot.slane %v485, 2
        %v487 = vadd.f32 %v485, %v486
        %v488 = vrot.slane %v487, 1
        %v489 = vadd.f32 %v487, %v488
        %v490 = vsel %vm462, %v482, 0.0
        %v491 = vrot.slane %v490, 4
        %v492 = vadd.f32 %v490, %v491
        %v493 = vrot.slane %v492, 2
        %v494 = vadd.f32 %v492, %v493
        %v495 = vrot.slane %v494, 1
        %v496 = vadd.f32 %v494, %v495
        %v497 = vrcp.pop %v489
        %v498 = vrcp.pop %v496
        %v499 = vmul.f32 %v480, %v497
        %v500 = vmul.f32 %v482, %v498
        %v501 = vmul.f32 %v499, %v387
        %v502 = vmul.f32 %v500, %v388
        %v503 = vmul.f32 %v460, %v387
        %v504 = vmul.f32 %v461, %v388
        %v505 = vmul.f32 %v501, %v460
        %v506 = vmul.f32 %v502, %v461
        %v507 = vadd.f32 %v505, %v506
        %v508 = vadd.f32 %v501, %v502
        %v509 = vadd.f32 %v503, %v504
        %v510 = vld [vmem:[#allocation2] sm:$0xf]
        %v511 = vadd.f32 %v510, %v507
        %512 = vst [vmem:[#allocation2] sm:$0xf] %v511
        %v513 = vld [vmem:[#allocation4] sm:$0xf]
        %v514 = vsub.f32 %v508, %v507
        %v515 = vadd.f32 %v513, %v514
        %516 = vst [vmem:[#allocation4] sm:$0xf] %v515
        %v517 = vld [vmem:[#allocation6] sm:$0xf]
        %v518 = vsub.f32 %v509, %v507
        %v519 = vadd.f32 %v517, %v518
        %520 = vst [vmem:[#allocation6] sm:$0xf] %v519
        %v521 = vmul.f32 %v460, %v442
        %v522 = vmul.f32 %v461, %v443
        %v523 = vsel %vm462, %v521, 0.0
        %v524 = vrot.slane %v523, 4
        %v525 = vadd.f32 %v523, %v524
        %v526 = vrot.slane %v525, 2
        %v527 = vadd.f32 %v525, %v526
        %v528 = vrot.slane %v527, 1
        %v529 = vadd.f32 %v527, %v528
        %v530 = vsel %vm462, %v522, 0.0
        %v531 = vrot.slane %v530, 4
        %v532 = vadd.f32 %v530, %v531
        %v533 = vrot.slane %v532, 2
        %v534 = vadd.f32 %v532, %v533
        %v535 = vrot.slane %v534, 1
        %v536 = vadd.f32 %v534, %v535
        %v537 = vlog2.pop %v489
        %v538 = vmul.f32 %v537, 0.6931472
        %v539 = vlog2.pop %v496
        %v540 = vmul.f32 %v539, 0.6931472
        %v541 = vadd.f32 %v538, %v469
        %v542 = vadd.f32 %v540, %v476
        %v543 = vsub.f32 %v541, %v529
        %v544 = vsub.f32 %v542, %v536
        %vm545 = vcmp.ne.s32.totalorder %v447, 255
        %v546 = vsel %vm545, 1, 0
        %v547 = vcvt.s32.f32 %v546
        %v550 = vcombine.low %v387, %v388
        %v552 = vunpack.c.l.s4 1966171168
        %v553 = vunpack.c.0.s8 %v552
        %v554 = vlaneseq
        %v555 = vshrl.u32 %v554, 7
        %v556 = vsub.s32 %v553, %v555
        %v557 = vrot.slane %v550, %v556
        %v559 = vunpack.c.l.s4 1966171168
        %v560 = vunpack.c.0.s8 %v559
        %v561 = vlaneseq
        %v562 = vshrl.u32 %v561, 7
        %v563 = vsub.s32 %v560, %v562
        %v564 = vrot.slane %v557, %v563
        %v566 = vmul.f32 %v547, %v564
        %v568 = vlaneseq
        %v569 = vshrl.u32 %v568, 7
        %v570 = vsub.s32 0, %v569
        %v571 = vrot.slane %v566, %v570
        %v572 = vlaneseq
        %v573 = vshrl.u32 %v572, 7
        %v574 = vsub.s32 1, %v573
        %v575 = vrot.slane %v566, %v574
        %v578 = vmul.f32 %v543, %v571
        %v579 = vmul.f32 %v544, %v575
        %v580 = vadd.f32 %v578, %v579
        %v581 = vrot.slane %v566, 1
        %v583 = vadd.f32 %v566, %v581
        %v584 = vld [vmem:[#allocation7] sm:$0x3]
        %v586 = vlaneseq
        %v587 = vshrl.u32 %v586, 7
        %v588 = vsub.s32 0, %v587
        %v589 = vrot.slane %v583, %v588
        %v591 = vsel %vm435, %v580, %v589
        %v592 = vadd.f32 %v584, %v591
        %593 = vst [vmem:[#allocation7] sm:$0x3] %v592
        // Predicated region
        $region33: #{tpu_custom_call.1} parent=27 // pred_check
          %p594 = pneg %p101
        $region34: #{tpu_custom_call.1} parent=27 // pred_check_branch
          %596 = sbr.rel (%p594) target = $region36
        $region35: #{tpu_custom_call.1} parent=27 // pred_region
          %s598 = ssub.s32 64, 64
          %599 = vsyncadd [#allocation3], %s598
          %s601 = sshll.u32 [#allocation2], 4
          %s602 = int_to_ptr.vmem [resolvable:$true] %s601
          %604 = dma.vmem_to_hbm [thread:$0]  %s602, 64, %s2, [#allocation3]
        $region36: #{tpu_custom_call.1} parent=27 // pred_fallthru
          _
        // Predicated region
        $region37: #{tpu_custom_call.1} parent=27 // pred_check
          %p605 = pneg %p122
        $region38: #{tpu_custom_call.1} parent=27 // pred_check_branch
          %607 = sbr.rel (%p605) target = $region40
        $region39: #{tpu_custom_call.1} parent=27 // pred_region
          %s609 = ssub.s32 64, 64
          %610 = vsyncadd [#allocation5], %s609
          %s612 = sshll.u32 [#allocation4], 4
          %s613 = int_to_ptr.vmem [resolvable:$true] %s612
          %615 = dma.vmem_to_hbm [thread:$0]  %s613, 64, %s3, [#allocation5]
        $region40: #{tpu_custom_call.1} parent=27 // pred_fallthru
          _
        // Predicated region
        $region41: #{tpu_custom_call.1} parent=27 // pred_check
          %p616 = pneg %p143
        $region42: #{tpu_custom_call.1} parent=27 // pred_check_branch
          %618 = sbr.rel (%p616) target = $region44
        $region43: #{tpu_custom_call.1} parent=27 // pred_region
          %s620 = ssub.s32 64, 64
          %621 = vsyncadd [#allocation5], %s620
          %s623 = sshll.u32 [#allocation6], 4
          %s624 = int_to_ptr.vmem [resolvable:$true] %s623
          %626 = dma.vmem_to_hbm [thread:$0]  %s624, 64, %s4, [#allocation5]
        $region44: #{tpu_custom_call.1} parent=27 // pred_fallthru
          _
        // Predicated region
        $region45: #{tpu_custom_call.1} parent=27 // pred_check
          %p627 = pneg %p164
        $region46: #{tpu_custom_call.1} parent=27 // pred_check_branch
          %629 = sbr.rel (%p627) target = $region48
        $region47: #{tpu_custom_call.1} parent=27 // pred_region
          %s631 = ssub.s32 32, 32
          %632 = vsyncadd [#allocation8], %s631
          %s634 = sshll.u32 [#allocation7], 4
          %s635 = int_to_ptr.vmem [resolvable:$true] %s634
          %637 = dma.vmem_to_hbm [thread:$0]  %s635, 32, %s5, [#allocation8]
        $region48: #{tpu_custom_call.1} parent=27 // pred_fallthru
          _
        // Predicated region
        $region49: #{tpu_custom_call.1} parent=27 // pred_check
          %p638 = pneg %p101
        $region50: #{tpu_custom_call.1} parent=27 // pred_check_branch
          %640 = sbr.rel (%p638) target = $region52
        $region51: #{tpu_custom_call.1} parent=27 // pred_region
          %641 = dma.done [#allocation3], 64
        $region52: #{tpu_custom_call.1} parent=27 // pred_fallthru
          _
        // Predicated region
        $region53: #{tpu_custom_call.1} parent=27 // pred_check
          %p642 = pneg %p122
        $region54: #{tpu_custom_call.1} parent=27 // pred_check_branch
          %644 = sbr.rel (%p642) target = $region56
        $region55: #{tpu_custom_call.1} parent=27 // pred_region
          %645 = dma.done [#allocation5], 64
        $region56: #{tpu_custom_call.1} parent=27 // pred_fallthru
          _
        // Predicated region
        $region57: #{tpu_custom_call.1} parent=27 // pred_check
          %p646 = pneg %p143
        $region58: #{tpu_custom_call.1} parent=27 // pred_check_branch
          %648 = sbr.rel (%p646) target = $region60
        $region59: #{tpu_custom_call.1} parent=27 // pred_region
          %649 = dma.done [#allocation5], 64
        $region60: #{tpu_custom_call.1} parent=27 // pred_fallthru
          _
        // Predicated region
        $region61: #{tpu_custom_call.1} parent=27 // pred_check
          %p650 = pneg %p164
        $region62: #{tpu_custom_call.1} parent=27 // pred_check_branch
          %652 = sbr.rel (%p650) target = $region64
        $region63: #{tpu_custom_call.1} parent=27 // pred_region
          %653 = dma.done [#allocation8], 32
        $region64: #{tpu_custom_call.1} parent=27 // pred_fallthru
          _
      $region28: #{tpu_custom_call.1} parent=5 // pred_fallthru
        _
      %p654 = scmp.le.s32.totalorder 2, %s15
      // Predicated region
      $region65: #{tpu_custom_call.1} parent=5 // pred_check
        %p655 = pneg %p654
      $region66: #{tpu_custom_call.1} parent=5 // pred_check_branch
        %657 = sbr.rel (%p655) target = $region68
      $region67: #{tpu_custom_call.1} parent=5 // pred_region
        %s658 = ssub.s32 %s15, 2
      $region68: #{tpu_custom_call.1} parent=5 // pred_fallthru
        _
    $region6: #{tpu_custom_call.1} parent=1 // loop_footer
      %s19 = sadd.s32 1, %s15
    $region7: #{tpu_custom_call.1} parent=1 // loop_footer_branch
      %14 = sbr.rel target = $region3
    $region8: #{tpu_custom_call.1} parent=1 // loop_exit
      _
    %659 = vsyncpa [#allocation3], 1
    %s660 = scalar_lea.sflag [#allocation3], 1
    %661 = vsyncpa %s660, 1
    %662 = vsyncpa [#allocation5], 1
    %663 = vsyncpa [#allocation8], 1

</llo_original>
